<compile_context>
chip_gen: v5e
topology: v5e:2x2
jax: 0.10.0
libtpu: 0.0.40
codegen_flags: <defaults>
</compile_context>

<pallas_src>
import jax
import jax.numpy as jnp
from jax import lax
from jax.experimental import pallas as pl
from jax.experimental.pallas import tpu as pltpu

BN_EPS = 1e-5


def _power_block_kernel(x_ref, mult_ref, gamma_ref, beta_ref, o_ref):
    """Grid step i handles power block i.

    x_ref:                    (N, W)     input (same block every step)
    mult_ref/gamma_ref/beta_ref: (1, 1, W)  params for this power block
    o_ref:                    (1, N, W)  output block i
    """
    i = pl.program_id(0)
    n, w = x_ref.shape

    beta = beta_ref[0].astype(jnp.float32)          # (1, W)

    @pl.when(i == 0)
    def _():
        # x^0 is constant across the batch -> batch variance is 0 and the
        # BN output is exactly beta; skip all compute for this block.
        o_ref[0] = jnp.broadcast_to(beta, (n, w)).astype(o_ref.dtype)

    @pl.when(i > 0)
    def _():
        x = x_ref[...].astype(jnp.float32)          # (N, W)
        # x ** i for dynamic i >= 1 via repeated multiply (power is tiny).
        pw = lax.fori_loop(1, i, lambda _, acc: acc * x, x)

        scaled = pw * (1.0 + mult_ref[0].astype(jnp.float32))   # (N, W)

        # One-pass per-feature batch statistics (biased variance).
        inv_n = 1.0 / n
        s = jnp.sum(scaled, axis=0, keepdims=True)              # (1, W)
        ss = jnp.sum(scaled * scaled, axis=0, keepdims=True)    # (1, W)
        mean = s * inv_n
        var = jnp.maximum(ss * inv_n - mean * mean, 0.0)
        inv_std = lax.rsqrt(var + BN_EPS)

        gamma = gamma_ref[0].astype(jnp.float32)                # (1, W)
        y = (scaled - mean) * (inv_std * gamma) + beta
        o_ref[0] = y.astype(o_ref.dtype)


def power_layer_forward(x, multipliers, gamma, beta, *, power):
    """x: (N, W); multipliers/gamma/beta: (1, W*power). Returns (N, W*power)."""
    n, w = x.shape
    feat = w * power
    assert multipliers.shape == (1, feat)
    assert gamma.shape == (1, feat)
    assert beta.shape == (1, feat)

    # Per-power parameter blocks: (1, power*W) -> (power, 1, W), block i holds
    # the params for feature columns [i*W, (i+1)*W).
    mult_p = multipliers.reshape(power, 1, w)
    gamma_p = gamma.reshape(power, 1, w)
    beta_p = beta.reshape(power, 1, w)

    grid_spec = pltpu.PrefetchScalarGridSpec(
        num_scalar_prefetch=0,
        grid=(power,),
        in_specs=[
            pl.BlockSpec((n, w), lambda i: (0, 0)),        # x (reused each step)
            pl.BlockSpec((1, 1, w), lambda i: (i, 0, 0)),  # multipliers block i
            pl.BlockSpec((1, 1, w), lambda i: (i, 0, 0)),  # gamma block i
            pl.BlockSpec((1, 1, w), lambda i: (i, 0, 0)),  # beta block i
        ],
        out_specs=pl.BlockSpec((1, n, w), lambda i: (i, 0, 0)),
    )

    out3 = pl.pallas_call(
        _power_block_kernel,
        out_shape=jax.ShapeDtypeStruct((power, n, w), x.dtype),
        grid_spec=grid_spec,
        compiler_params=pltpu.CompilerParams(
            # Power blocks are fully independent -> shard across the two
            # TensorCores on v7x; harmless on v5e/v6e.
            dimension_semantics=("parallel",),
        ),
    )(x, mult_p, gamma_p, beta_p)

    # (power, N, W) -> hstack layout (N, W*power): out[:, i*W:(i+1)*W] = block i.
    return jnp.transpose(out3, (1, 0, 2)).reshape(n, feat)


def reference_forward(x, multipliers, gamma, beta, *, power):
    powers = jnp.concatenate([x ** i for i in range(power)], axis=-1)
    scaled = powers * (1.0 + multipliers)
    mean = jnp.mean(scaled, axis=0, keepdims=True)
    var = jnp.mean((scaled - mean) ** 2, axis=0, keepdims=True)
    return (scaled - mean) * lax.rsqrt(var + BN_EPS) * gamma + beta


if __name__ == "__main__":
    input_width = 16
    power = 3
    batch = 8
    feat = input_width * power

    key = jax.random.PRNGKey(0)
    kx, km, kg, kb = jax.random.split(key, 4)

    x = jax.random.normal(kx, (batch, input_width), dtype=jnp.float32)
    # Module init is zeros / ones / zeros; use small random values so every
    # code path (multipliers, gamma, beta) is actually exercised.
    multipliers = 0.1 * jax.random.normal(km, (1, feat), dtype=jnp.float32)
    gamma = 1.0 + 0.1 * jax.random.normal(kg, (1, feat), dtype=jnp.float32)
    beta = 0.1 * jax.random.normal(kb, (1, feat), dtype=jnp.float32)

    out = power_layer_forward(x, multipliers, gamma, beta, power=power)
    out = jax.block_until_ready(out)
    ref = reference_forward(x, multipliers, gamma, beta, power=power)

    assert out.shape == (batch, feat)
    # Powers >= 1: full BN math parity with the naive reference.
    assert jnp.allclose(out[:, input_width:], ref[:, input_width:],
                        atol=1e-4, rtol=1e-4)
    # x^0 block: batch-constant feature -> BN output is exactly beta; the naive
    # reference matches only up to fp summation noise amplified by rsqrt(eps).
    assert jnp.allclose(out[:, :input_width], ref[:, :input_width], atol=1e-3)

    print("KERNEL_OK")
</pallas_src>

<mosaic_0001>
module attributes {stable_mosaic.version = 11 : i64} {
  func.func @_power_block_kernel(%arg0: i32, %arg1: memref<8x16xf32, #tpu.memory_space<vmem>>, %arg2: memref<1x1x16xf32, #tpu.memory_space<vmem>>, %arg3: memref<1x1x16xf32, #tpu.memory_space<vmem>>, %arg4: memref<1x1x16xf32, #tpu.memory_space<vmem>>, %arg5: memref<1x8x16xf32, #tpu.memory_space<vmem>>) attributes {dimension_semantics = [#tpu.dimension_semantics<parallel>], iteration_bounds = array<i64: 3>, scalar_prefetch = 0 : i64, scratch_operands = 0 : i64, tpu.core_type = #tpu.core_type<tc>, window_params = [{pipeline_mode = #tpu.pipeline_mode<synchronous>, transform_indices = @transform_0, window_bounds = array<i64: 8, 16>}, {transform_indices = @transform_1, window_bounds = array<i64: 1, 1, 16>}, {transform_indices = @transform_2, window_bounds = array<i64: 1, 1, 16>}, {transform_indices = @transform_3, window_bounds = array<i64: 1, 1, 16>}, {transform_indices = @transform_4, window_bounds = array<i64: 1, 8, 16>}]} {
    %c0 = arith.constant 0 : index
    %c0_0 = arith.constant 0 : index
    %c0_1 = arith.constant 0 : index
    %0 = vector.load %arg4[%c0, %c0_0, %c0_1] : memref<1x1x16xf32, #tpu.memory_space<vmem>>, vector<1x1x16xf32>
    %1 = vector.shape_cast %0 : vector<1x1x16xf32> to vector<1x16xf32>
    %c0_i32 = arith.constant 0 : i32
    %2 = arith.cmpi eq, %arg0, %c0_i32 : i32
    %3 = arith.extui %2 : i1 to i32
    %c0_i32_2 = arith.constant 0 : i32
    %4 = arith.cmpi ne, %3, %c0_i32_2 : i32
    scf.if %4 {
      %8 = vector.shape_cast %1 : vector<1x16xf32> to vector<1x16xf32>
      %9 = vector.broadcast %8 : vector<1x16xf32> to vector<8x16xf32>
      %c0_5 = arith.constant 0 : index
      %c0_6 = arith.constant 0 : index
      %c0_7 = arith.constant 0 : index
      %10 = vector.load %arg5[%c0_5, %c0_6, %c0_7] : memref<1x8x16xf32, #tpu.memory_space<vmem>>, vector<1x8x16xf32>
      %11 = vector.shape_cast %10 : vector<1x8x16xf32> to vector<8x16xf32>
      %12 = vector.shape_cast %9 : vector<8x16xf32> to vector<1x8x16xf32>
      tpu.vector_store %arg5[%c0_5, %c0_6, %c0_7], %12 {strides = array<i32>} : memref<1x8x16xf32, #tpu.memory_space<vmem>>, vector<1x8x16xf32>,
    } else {
    }
    %c0_i32_3 = arith.constant 0 : i32
    %5 = arith.cmpi sgt, %arg0, %c0_i32_3 : i32
    %6 = arith.extui %5 : i1 to i32
    %c0_i32_4 = arith.constant 0 : i32
    %7 = arith.cmpi ne, %6, %c0_i32_4 : i32
    scf.if %7 {
      %c0_5 = arith.constant 0 : index
      %c0_6 = arith.constant 0 : index
      %8 = vector.load %arg1[%c0_5, %c0_6] : memref<8x16xf32, #tpu.memory_space<vmem>>, vector<8x16xf32>
      %c1_i32 = arith.constant 1 : i32
      %9 = arith.subi %arg0, %c1_i32 : i32
      %10 = arith.addi %c1_i32, %9 : i32
      %c1_i32_7 = arith.constant 1 : i32
      %11 = scf.for %arg6 = %c1_i32 to %10 step %c1_i32_7 iter_args(%arg7 = %8) -> (vector<8x16xf32>)  : i32 {
        %46 = arith.mulf %arg7, %8 : vector<8x16xf32>
        scf.yield %46 : vector<8x16xf32>
      }
      %c0_8 = arith.constant 0 : index
      %c0_9 = arith.constant 0 : index
      %c0_10 = arith.constant 0 : index
      %12 = vector.load %arg2[%c0_8, %c0_9, %c0_10] : memref<1x1x16xf32, #tpu.memory_space<vmem>>, vector<1x1x16xf32>
      %13 = vector.shape_cast %12 : vector<1x1x16xf32> to vector<1x16xf32>
      %cst = arith.constant 1.000000e+00 : f32
      %14 = vector.broadcast %cst : f32 to vector<1x16xf32>
      %15 = arith.addf %14, %13 : vector<1x16xf32>
      %16 = vector.broadcast %15 : vector<1x16xf32> to vector<8x16xf32>
      %17 = arith.mulf %11, %16 : vector<8x16xf32>
      %cst_11 = arith.constant dense<0.000000e+00> : vector<16xf32>
      %18 = vector.multi_reduction <add>, %17, %cst_11 [0] : vector<8x16xf32> to vector<16xf32>
      %19 = vector.shape_cast %18 : vector<16xf32> to vector<1x16xf32>
      %20 = arith.mulf %17, %17 : vector<8x16xf32>
      %cst_12 = arith.constant dense<0.000000e+00> : vector<16xf32>
      %21 = vector.multi_reduction <add>, %20, %cst_12 [0] : vector<8x16xf32> to vector<16xf32>
      %22 = vector.shape_cast %21 : vector<16xf32> to vector<1x16xf32>
      %cst_13 = arith.constant 1.250000e-01 : f32
      %23 = vector.broadcast %cst_13 : f32 to vector<1x16xf32>
      %24 = arith.mulf %19, %23 : vector<1x16xf32>
      %cst_14 = arith.constant 1.250000e-01 : f32
      %25 = vector.broadcast %cst_14 : f32 to vector<1x16xf32>
      %26 = arith.mulf %22, %25 : vector<1x16xf32>
      %27 = arith.mulf %24, %24 : vector<1x16xf32>
      %28 = arith.subf %26, %27 : vector<1x16xf32>
      %cst_15 = arith.constant 0.000000e+00 : f32
      %29 = vector.broadcast %cst_15 : f32 to vector<1x16xf32>
      %30 = arith.maximumf %28, %29 : vector<1x16xf32>
      %cst_16 = arith.constant 9.99999974E-6 : f32
      %31 = vector.broadcast %cst_16 : f32 to vector<1x16xf32>
      %32 = arith.addf %30, %31 : vector<1x16xf32>
      %33 = math.rsqrt %32 : vector<1x16xf32>
      %c0_17 = arith.constant 0 : index
      %c0_18 = arith.constant 0 : index
      %c0_19 = arith.constant 0 : index
      %34 = vector.load %arg3[%c0_17, %c0_18, %c0_19] : memref<1x1x16xf32, #tpu.memory_space<vmem>>, vector<1x1x16xf32>
      %35 = vector.shape_cast %34 : vector<1x1x16xf32> to vector<1x16xf32>
      %36 = vector.broadcast %24 : vector<1x16xf32> to vector<8x16xf32>
      %37 = arith.subf %17, %36 : vector<8x16xf32>
      %38 = arith.mulf %33, %35 : vector<1x16xf32>
      %39 = vector.broadcast %38 : vector<1x16xf32> to vector<8x16xf32>
      %40 = arith.mulf %37, %39 : vector<8x16xf32>
      %41 = vector.broadcast %1 : vector<1x16xf32> to vector<8x16xf32>
      %42 = arith.addf %40, %41 : vector<8x16xf32>
      %c0_20 = arith.constant 0 : index
      %c0_21 = arith.constant 0 : index
      %c0_22 = arith.constant 0 : index
      %43 = vector.load %arg5[%c0_20, %c0_21, %c0_22] : memref<1x8x16xf32, #tpu.memory_space<vmem>>, vector<1x8x16xf32>
      %44 = vector.shape_cast %43 : vector<1x8x16xf32> to vector<8x16xf32>
      %45 = vector.shape_cast %42 : vector<8x16xf32> to vector<1x8x16xf32>
      tpu.vector_store %arg5[%c0_20, %c0_21, %c0_22], %45 {strides = array<i32>} : memref<1x8x16xf32, #tpu.memory_space<vmem>>, vector<1x8x16xf32>,
    } else {
    }
    return
  }
  func.func @transform_0(%arg0: i32) -> (i32, i32) {
    %c0_i32 = arith.constant 0 : i32
    %c0_i32_0 = arith.constant 0 : i32
    %c0_i32_1 = arith.constant 0 : i32
    return %c0_i32, %c0_i32_0 : i32, i32
  }
  func.func @transform_1(%arg0: i32) -> (i32, i32, i32) {
    %c0_i32 = arith.constant 0 : i32
    %c0_i32_0 = arith.constant 0 : i32
    %c0_i32_1 = arith.constant 0 : i32
    return %arg0, %c0_i32, %c0_i32_0 : i32, i32, i32
  }
  func.func @transform_2(%arg0: i32) -> (i32, i32, i32) {
    %c0_i32 = arith.constant 0 : i32
    %c0_i32_0 = arith.constant 0 : i32
    %c0_i32_1 = arith.constant 0 : i32
    return %arg0, %c0_i32, %c0_i32_0 : i32, i32, i32
  }
  func.func @transform_3(%arg0: i32) -> (i32, i32, i32) {
    %c0_i32 = arith.constant 0 : i32
    %c0_i32_0 = arith.constant 0 : i32
    %c0_i32_1 = arith.constant 0 : i32
    return %arg0, %c0_i32, %c0_i32_0 : i32, i32, i32
  }
  func.func @transform_4(%arg0: i32) -> (i32, i32, i32) {
    %c0_i32 = arith.constant 0 : i32
    %c0_i32_0 = arith.constant 0 : i32
    %c0_i32_1 = arith.constant 0 : i32
    return %arg0, %c0_i32, %c0_i32_0 : i32, i32, i32
  }
}

</mosaic_0001>

<llo_original>
// kernel: tpu_custom_call.1
$region0: #{tpu_custom_call.1}
  #allocation0 [shape = 'u32[]', space=smem, size = 0x4, offset = 0x4, fixed_abs, tag = 'smem constant byte address 0x4 - core index']
  #allocation1 [shape = 'u32[72,128]{1,0:T(1,128)}', space=vmem, size = 0x9000, scoped, tag = 'internal scratch']
  %s0 = inlined_call_operand.hbm [shape: f32[8,16], index: 0, kind: input, shape index: {}]
  %s1 = inlined_call_operand.hbm [shape: f32[3,1,16], index: 1, kind: input, shape index: {}]
  %s2 = inlined_call_operand.hbm [shape: f32[3,1,16], index: 2, kind: input, shape index: {}]
  %s3 = inlined_call_operand.hbm [shape: f32[3,1,16], index: 3, kind: input, shape index: {}]
  %s4 = inlined_call_operand.hbm [shape: f32[3,8,16], index: 4, kind: output, shape index: {}]
  %s5 = sld [smem:[#allocation0]]
  $region80: #{tpu_custom_call.1} parent=0
    _
  %s7 = ssub.s32 1, %s5
  %s8 = scalar_select 0, %s7, %s5
  $region1: #{tpu_custom_call.1} parent=0
    #allocation2 [shape = 'u8[4096]{0}', space=vmem, size = 0x1000, scoped, tag = 'input window, operand 0, single buffered']
    #allocation3 [shape = 's32[2]{0}', space=sflag, size = 0x8, scoped, tag = 'scoped memory for tpu_custom_call.1']
    #allocation4 [shape = 's32[2]{0}', space=sflag, size = 0x8, scoped, tag = 'scoped memory for tpu_custom_call.1']
    #allocation5 [shape = 'u8[1024]{0}', space=vmem, size = 0x400, scoped, tag = 'input window, operand 1']
    #allocation6 [shape = 's32[2]{0}', space=sflag, size = 0x8, scoped, tag = 'scoped memory for tpu_custom_call.1']
    #allocation7 [shape = 'u8[1024]{0}', space=vmem, size = 0x400, scoped, tag = 'input window, operand 2']
    #allocation8 [shape = 'u8[1024]{0}', space=vmem, size = 0x400, scoped, tag = 'input window, operand 3']
    #allocation9 [shape = 's32[2]{0}', space=sflag, size = 0x8, scoped, tag = 'scoped memory for tpu_custom_call.1']
    #allocation10 [shape = 'u8[8192]{0}', space=vmem, size = 0x2000, scoped, tag = 'output window, operand 0']
    %9 = vsyncpa [#allocation3], 0
    %10 = vsyncpa [#allocation6], 0
    %s11 = scalar_lea.sflag [#allocation6], 1
    %12 = vsyncpa %s11, 0
    %13 = vsyncpa [#allocation9], 0
    %s14 = scalar_lea.sflag [#allocation9], 1
    %15 = vsyncpa %s14, 0
    %16 = vsyncpa [#allocation4], 0
    %s17 = scalar_lea.sflag [#allocation4], 1
    %18 = vsyncpa %s17, 0
    loop: start=0, step=1, limit=5
    $region2: #{tpu_custom_call.1} parent=1 // loop_pre_header
      _
    $region3: #{tpu_custom_call.1} parent=1 // loop_header
      %s20 = sphi 0, %s24
      %p21 = scmp.ge.s32.totalorder %s20, 5
      %s28 = sphi 0, %s28
      %s30 = sphi 0, %s28
      %s31 = sphi 0, %s30
      %s45 = sphi 0, %s31
      %s51 = sphi 0, %s53
      %s54 = sphi 0, %s51
      %s55 = sphi 0, %s54
      %s71 = sphi 0, %s55
      %s77 = sphi 0, %s79
      %s80 = sphi 0, %s77
      %s81 = sphi 0, %s80
      %s97 = sphi 0, %s81
      %s103 = sphi 0, %s105
      %s106 = sphi 0, %s103
      %s107 = sphi 0, %s106
      %s123 = sphi 0, %s107
      %s129 = sphi 0, %s131
      %s132 = sphi 0, %s129
      %s133 = sphi 0, %s132
      %s149 = sphi 0, %s133
    $region4: #{tpu_custom_call.1} parent=1 // loop_header_branch
      %23 = sbr.rel (%p21) target = $region8
    $region5: #{tpu_custom_call.1} parent=1 // loop_body
      %s25 = ssub.s32 %s20, 1
      %s26 = ssub.s32 %s20, 2
      %s27 = sadd.s32 %s20, 1
      %s29 = sadd.s32 %s28, 1
      %p32 = scmp.eq.s32.totalorder %s20, 2
      %p33 = scmp.ne.s32.totalorder %s28, %s30
      %p34 = scmp.eq.s32.totalorder %s20, 0
      %p35 = por %p33, %p34
      %p36 = scmp.ne.s32.totalorder %s28, %s30
      %p37 = scmp.eq.s32.totalorder %s25, 2
      %p38 = por %p36, %p37
      %p39 = scmp.ne.s32.totalorder %s30, %s31
      %p40 = scmp.eq.s32.totalorder %s25, 0
      %p41 = por %p39, %p40
      %p42 = scmp.ne.s32.totalorder %s30, %s31
      %p43 = scmp.eq.s32.totalorder %s26, 2
      %p44 = por %p42, %p43
      %p46 = scmp.ne.s32.totalorder %s31, %s45
      %p47 = scmp.eq.s32.totalorder %s26, 0
      %p48 = por %p46, %p47
      %s49 = ssub.s32 %s20, %s27
      %p50 = scmp.eq.s32.totalorder %s49, 0
      %s52 = sadd.s32 %s51, 1
      %s53 = scalar_select %p50, %s51, %s52
      %p56 = pneg %p50
      %p57 = scmp.eq.s32.totalorder %s20, 2
      %p58 = por %p56, %p57
      %p59 = scmp.ne.s32.totalorder %s51, %s54
      %p60 = scmp.eq.s32.totalorder %s20, 0
      %p61 = por %p59, %p60
      %p62 = scmp.ne.s32.totalorder %s51, %s54
      %p63 = scmp.eq.s32.totalorder %s25, 2
      %p64 = por %p62, %p63
      %p65 = scmp.ne.s32.totalorder %s54, %s55
      %p66 = scmp.eq.s32.totalorder %s25, 0
      %p67 = por %p65, %p66
      %p68 = scmp.ne.s32.totalorder %s54, %s55
      %p69 = scmp.eq.s32.totalorder %s26, 2
      %p70 = por %p68, %p69
      %p72 = scmp.ne.s32.totalorder %s55, %s71
      %p73 = scmp.eq.s32.totalorder %s26, 0
      %p74 = por %p72, %p73
      %s75 = ssub.s32 %s20, %s27
      %p76 = scmp.eq.s32.totalorder %s75, 0
      %s78 = sadd.s32 %s77, 1
      %s79 = scalar_select %p76, %s77, %s78
      %p82 = pneg %p76
      %p83 = scmp.eq.s32.totalorder %s20, 2
      %p84 = por %p82, %p83
      %p85 = scmp.ne.s32.totalorder %s77, %s80
      %p86 = scmp.eq.s32.totalorder %s20, 0
      %p87 = por %p85, %p86
      %p88 = scmp.ne.s32.totalorder %s77, %s80
      %p89 = scmp.eq.s32.totalorder %s25, 2
      %p90 = por %p88, %p89
      %p91 = scmp.ne.s32.totalorder %s80, %s81
      %p92 = scmp.eq.s32.totalorder %s25, 0
      %p93 = por %p91, %p92
      %p94 = scmp.ne.s32.totalorder %s80, %s81
      %p95 = scmp.eq.s32.totalorder %s26, 2
      %p96 = por %p94, %p95
      %p98 = scmp.ne.s32.totalorder %s81, %s97
      %p99 = scmp.eq.s32.totalorder %s26, 0
      %p100 = por %p98, %p99
      %s101 = ssub.s32 %s20, %s27
      %p102 = scmp.eq.s32.totalorder %s101, 0
      %s104 = sadd.s32 %s103, 1
      %s105 = scalar_select %p102, %s103, %s104
      %p108 = pneg %p102
      %p109 = scmp.eq.s32.totalorder %s20, 2
      %p110 = por %p108, %p109
      %p111 = scmp.ne.s32.totalorder %s103, %s106
      %p112 = scmp.eq.s32.totalorder %s20, 0
      %p113 = por %p111, %p112
      %p114 = scmp.ne.s32.totalorder %s103, %s106
      %p115 = scmp.eq.s32.totalorder %s25, 2
      %p116 = por %p114, %p115
      %p117 = scmp.ne.s32.totalorder %s106, %s107
      %p118 = scmp.eq.s32.totalorder %s25, 0
      %p119 = por %p117, %p118
      %p120 = scmp.ne.s32.totalorder %s106, %s107
      %p121 = scmp.eq.s32.totalorder %s26, 2
      %p122 = por %p120, %p121
      %p124 = scmp.ne.s32.totalorder %s107, %s123
      %p125 = scmp.eq.s32.totalorder %s26, 0
      %p126 = por %p124, %p125
      %s127 = ssub.s32 %s20, %s27
      %p128 = scmp.eq.s32.totalorder %s127, 0
      %s130 = sadd.s32 %s129, 1
      %s131 = scalar_select %p128, %s129, %s130
      %p134 = pneg %p128
      %p135 = scmp.eq.s32.totalorder %s20, 2
      %p136 = por %p134, %p135
      %p137 = scmp.ne.s32.totalorder %s129, %s132
      %p138 = scmp.eq.s32.totalorder %s20, 0
      %p139 = por %p137, %p138
      %p140 = scmp.ne.s32.totalorder %s129, %s132
      %p141 = scmp.eq.s32.totalorder %s25, 2
      %p142 = por %p140, %p141
      %p143 = scmp.ne.s32.totalorder %s132, %s133
      %p144 = scmp.eq.s32.totalorder %s25, 0
      %p145 = por %p143, %p144
      %p146 = scmp.ne.s32.totalorder %s132, %s133
      %p147 = scmp.eq.s32.totalorder %s26, 2
      %p148 = por %p146, %p147
      %p150 = scmp.ne.s32.totalorder %s133, %s149
      %p151 = scmp.eq.s32.totalorder %s26, 0
      %p152 = por %p150, %p151
      %p153 = scmp.le.s32.totalorder 1, %s20
      %p154 = scmp.lt.s32.totalorder %s20, 4
      %p155 = pnand %p153, %p154
      %p156 = pneg %p155
      // Predicated region
      $region9: #{tpu_custom_call.1} parent=5 // pred_check
        _
      $region10: #{tpu_custom_call.1} parent=5 // pred_check_branch
        %158 = sbr.rel (%p155) target = $region12
      $region11: #{tpu_custom_call.1} parent=5 // pred_region
        %s159 = ssub.s32 %s20, 1
        // Predicated region
        $region13: #{tpu_custom_call.1} parent=11 // pred_check
          %p160 = pneg %p41
        $region14: #{tpu_custom_call.1} parent=11 // pred_check_branch
          %162 = sbr.rel (%p160) target = $region16
        $region15: #{tpu_custom_call.1} parent=11 // pred_region
          %164 = vsyncadd [#allocation3], 0
          %s166 = sshll.u32 %s0, 4
          %s167 = int_to_ptr.hbm [resolvable:$true] %s166
          %s168 = sshll.u32 [#allocation2], 4
          %s169 = int_to_ptr.vmem [resolvable:$true] %s168
          %171 = dma.hbm_to_vmem [thread:$0]  %s167, 128, %s169, [#allocation3]
        $region16: #{tpu_custom_call.1} parent=11 // pred_fallthru
          _
      $region12: #{tpu_custom_call.1} parent=5 // pred_fallthru
        _
      %p172 = scmp.lt.s32.totalorder %s20, 3
      // Predicated region
      $region17: #{tpu_custom_call.1} parent=5 // pred_check
        %p173 = pneg %p172
      $region18: #{tpu_custom_call.1} parent=5 // pred_check_branch
        %175 = sbr.rel (%p173) target = $region20
      $region19: #{tpu_custom_call.1} parent=5 // pred_region
        // Predicated region
        $region21: #{tpu_custom_call.1} parent=19 // pred_check
          %p176 = pneg %p61
        $region22: #{tpu_custom_call.1} parent=19 // pred_check_branch
          %178 = sbr.rel (%p176) target = $region24
        $region23: #{tpu_custom_call.1} parent=19 // pred_region
          %s179 = sand.u32 %s20, 1
          %s180 = scalar_lea.sflag [#allocation6], %s179
          %s181 = sand.u32 %s51, 1
          %s182 = scalar_lea.vmem [#allocation5], %s181
          %184 = vsyncadd %s180, 0
          %s185 = scalar_lea.hbm %s1, %s20
          %s187 = sshll.u32 %s185, 4
          %s188 = int_to_ptr.hbm [resolvable:$true] %s187
          %s189 = sshll.u32 %s182, 4
          %s190 = int_to_ptr.vmem [resolvable:$true] %s189
          %192 = dma.hbm_to_vmem [thread:$0]  %s188, 16, %s190, %s180
        $region24: #{tpu_custom_call.1} parent=19 // pred_fallthru
          _
        // Predicated region
        $region25: #{tpu_custom_call.1} parent=19 // pred_check
          %p193 = pneg %p87
        $region26: #{tpu_custom_call.1} parent=19 // pred_check_branch
          %195 = sbr.rel (%p193) target = $region28
        $region27: #{tpu_custom_call.1} parent=19 // pred_region
          %s196 = sand.u32 %s20, 1
          %s197 = scalar_lea.sflag [#allocation6], %s196
          %s198 = sand.u32 %s77, 1
          %s199 = scalar_lea.vmem [#allocation7], %s198
          %201 = vsyncadd %s197, 0
          %s202 = scalar_lea.hbm %s2, %s20
          %s204 = sshll.u32 %s202, 4
          %s205 = int_to_ptr.hbm [resolvable:$true] %s204
          %s206 = sshll.u32 %s199, 4
          %s207 = int_to_ptr.vmem [resolvable:$true] %s206
          %209 = dma.hbm_to_vmem [thread:$0]  %s205, 16, %s207, %s197
        $region28: #{tpu_custom_call.1} parent=19 // pred_fallthru
          _
        // Predicated region
        $region29: #{tpu_custom_call.1} parent=19 // pred_check
          %p210 = pneg %p113
        $region30: #{tpu_custom_call.1} parent=19 // pred_check_branch
          %212 = sbr.rel (%p210) target = $region32
        $region31: #{tpu_custom_call.1} parent=19 // pred_region
          %s213 = sand.u32 %s103, 1
          %s214 = scalar_lea.sflag [#allocation9], %s213
          %s215 = sand.u32 %s103, 1
          %s216 = scalar_lea.vmem [#allocation8], %s215
          %218 = vsyncadd %s214, 0
          %s219 = scalar_lea.hbm %s3, %s20
          %s221 = sshll.u32 %s219, 4
          %s222 = int_to_ptr.hbm [resolvable:$true] %s221
          %s223 = sshll.u32 %s216, 4
          %s224 = int_to_ptr.vmem [resolvable:$true] %s223
          %226 = dma.hbm_to_vmem [thread:$0]  %s222, 16, %s224, %s214
        $region32: #{tpu_custom_call.1} parent=19 // pred_fallthru
          _
      $region20: #{tpu_custom_call.1} parent=5 // pred_fallthru
        _
      %p227 = scmp.le.s32.totalorder 1, %s20
      %p228 = scmp.lt.s32.totalorder %s20, 4
      %p229 = pnand %p227, %p228
      %p230 = pneg %p229
      // Predicated region
      $region33: #{tpu_custom_call.1} parent=5 // pred_check
        _
      $region34: #{tpu_custom_call.1} parent=5 // pred_check_branch
        %232 = sbr.rel (%p229) target = $region36
      $region35: #{tpu_custom_call.1} parent=5 // pred_region
        %s233 = ssub.s32 %s20, 1
        // Predicated region
        $region37: #{tpu_custom_call.1} parent=35 // pred_check
          %p234 = pneg %p41
        $region38: #{tpu_custom_call.1} parent=35 // pred_check_branch
          %236 = sbr.rel (%p234) target = $region40
        $region39: #{tpu_custom_call.1} parent=35 // pred_region
          %238 = dma.done [#allocation3], 128
        $region40: #{tpu_custom_call.1} parent=35 // pred_fallthru
          _
        %s239 = sand.u32 %s25, 1
        %s240 = scalar_lea.sflag [#allocation6], %s239
        %s241 = sand.u32 %s54, 1
        %s242 = scalar_lea.vmem [#allocation5], %s241
        // Predicated region
        $region41: #{tpu_custom_call.1} parent=35 // pred_check
          %p243 = pneg %p67
        $region42: #{tpu_custom_call.1} parent=35 // pred_check_branch
          %245 = sbr.rel (%p243) target = $region44
        $region43: #{tpu_custom_call.1} parent=35 // pred_region
          %247 = dma.done %s240, 16
        $region44: #{tpu_custom_call.1} parent=35 // pred_fallthru
          _
        %s248 = sand.u32 %s25, 1
        %s249 = scalar_lea.sflag [#allocation6], %s248
        %s250 = sand.u32 %s80, 1
        %s251 = scalar_lea.vmem [#allocation7], %s250
        // Predicated region
        $region45: #{tpu_custom_call.1} parent=35 // pred_check
          %p252 = pneg %p93
        $region46: #{tpu_custom_call.1} parent=35 // pred_check_branch
          %254 = sbr.rel (%p252) target = $region48
        $region47: #{tpu_custom_call.1} parent=35 // pred_region
          %256 = dma.done %s249, 16
        $region48: #{tpu_custom_call.1} parent=35 // pred_fallthru
          _
        %s257 = sand.u32 %s106, 1
        %s258 = scalar_lea.sflag [#allocation9], %s257
        %s259 = sand.u32 %s106, 1
        %s260 = scalar_lea.vmem [#allocation8], %s259
        // Predicated region
        $region49: #{tpu_custom_call.1} parent=35 // pred_check
          %p261 = pneg %p119
        $region50: #{tpu_custom_call.1} parent=35 // pred_check_branch
          %263 = sbr.rel (%p261) target = $region52
        $region51: #{tpu_custom_call.1} parent=35 // pred_region
          %265 = dma.done %s258, 16
        $region52: #{tpu_custom_call.1} parent=35 // pred_fallthru
          _
        %p266 = pneg %p41
        %p267 = pneg %p38
        %s268 = sand.u32 %s25, 1
        %s269 = scalar_lea.sflag [#allocation6], %s268
        %s270 = sand.u32 %s54, 1
        %s271 = scalar_lea.vmem [#allocation5], %s270
        %p272 = pneg %p67
        %p273 = pneg %p64
        %s274 = sand.u32 %s25, 1
        %s275 = scalar_lea.sflag [#allocation6], %s274
        %s276 = sand.u32 %s80, 1
        %s277 = scalar_lea.vmem [#allocation7], %s276
        %p278 = pneg %p93
        %p279 = pneg %p90
        %s280 = sand.u32 %s106, 1
        %s281 = scalar_lea.sflag [#allocation9], %s280
        %s282 = sand.u32 %s106, 1
        %s283 = scalar_lea.vmem [#allocation8], %s282
        %p284 = pneg %p119
        %p285 = pneg %p116
        %p286 = pneg %p145
        %p287 = pneg %p142
        %s288 = sand.u32 %s132, 1
        %s289 = scalar_lea.sflag [#allocation4], %s288
        %s290 = sand.u32 %s132, 1
        %s291 = smul.addr %s290, 8
        %s292 = scalar_lea.vmem [#allocation10], %s291
        %v293 = vld [vmem:[%s260] sm:$0x1]
        %p294 = scmp.eq.s32.totalorder %s25, 0
        // Predicated region
        $region53: #{tpu_custom_call.1} parent=35 // pred_check
          %p295 = pneg %p294
        $region54: #{tpu_custom_call.1} parent=35 // pred_check_branch
          %297 = sbr.rel (%p295) target = $region56
        $region55: #{tpu_custom_call.1} parent=35 // pred_region
          %v299 = vperm.slane %v293, 0
          %vm301 = vcmask 130048
          %302 = vst.msk [vmem:[%s292] sm:$0xff] %vm301, %v299
        $region56: #{tpu_custom_call.1} parent=35 // pred_fallthru
          _
        %p303 = scmp.gt.s32.totalorder %s25, 0
        // Predicated region
        $region57: #{tpu_custom_call.1} parent=35 // pred_check
          %p304 = pneg %p303
        $region58: #{tpu_custom_call.1} parent=35 // pred_check_branch
          %306 = sbr.rel (%p304) target = $region60
        $region59: #{tpu_custom_call.1} parent=35 // pred_region
          %v307 = vld [vmem:[#allocation2] sm:$0xff]
          // While loop
          $region61: #{tpu_custom_call.1} parent=59 // loop_pre_header
            _
          $region62: #{tpu_custom_call.1} parent=59 // loop_header
            %s309 = sphi 1, %s311
            %p310 = scmp.ge.s32.totalorder %s309, %s25
            %v314 = vphi %v307, %v315
          $region63: #{tpu_custom_call.1} parent=59 // loop_header_branch
            %313 = sbr.rel (%p310) target = $region67
          $region64: #{tpu_custom_call.1} parent=59 // loop_body
            %v315 = vmul.f32 %v314, %v307
          $region65: #{tpu_custom_call.1} parent=59 // loop_footer
            %s311 = sadd.s32 %s309, 1
          $region66: #{tpu_custom_call.1} parent=59 // loop_footer_branch
            %308 = sbr.rel target = $region62
          $region67: #{tpu_custom_call.1} parent=59 // loop_exit
            _
          %v316 = vld [vmem:[%s242] sm:$0x1]
          %v317 = vadd.f32 %v316, 1.0
          %v319 = vperm.slane %v317, 0
          %v321 = vmul.f32 %v314, %v319
          %vm322 = vcmask 130048
          %v323 = vsel %vm322, %v321, 0.0
          %v324 = vrot.slane %v323, 4
          %v325 = vadd.f32 %v323, %v324
          %v326 = vrot.slane %v325, 2
          %v327 = vadd.f32 %v325, %v326
          %v328 = vrot.slane %v327, 1
          %v329 = vadd.f32 %v327, %v328
          %v330 = vmul.f32 %v321, %v321
          %v331 = vsel %vm322, %v330, 0.0
          %v332 = vrot.slane %v331, 4
          %v333 = vadd.f32 %v331, %v332
          %v334 = vrot.slane %v333, 2
          %v335 = vadd.f32 %v333, %v334
          %v336 = vrot.slane %v335, 1
          %v337 = vadd.f32 %v335, %v336
          %v338 = vmul.f32 %v329, 0.125
          %v339 = vmul.f32 %v337, 0.125
          %v340 = vmul.f32 %v338, %v338
          %v341 = vsub.f32 %v339, %v340
          %v342 = vmax.f32 %v341, 0.0
          %v343 = vadd.f32 %v342, 1e-05
          %v344 = vrsqrt.pop %v343
          %v345 = vmul.f32 %v344, %v343
          %v346 = vmul.f32 %v345, %v344
          %v347 = vmul.f32 0.5, %v346
          %v348 = vsub.f32 1.5, %v347
          %v349 = vmul.f32 %v344, %v348
          %vm350 = vweird.f32 %v343
          %vm351 = vweird.f32 %v344
          %vm352 = vmor %vm350, %vm351
          %v353 = vsel %vm352, %v344, %v349
          %v354 = vld [vmem:[%s251] sm:$0x1]
          %v355 = vsub.f32 %v321, %v338
          %v356 = vmul.f32 %v353, %v354
          %v357 = vperm.slane %v356, 0
          %v358 = vmul.f32 %v355, %v357
          %v360 = vperm.slane %v293, 0
          %v362 = vadd.f32 %v358, %v360
          %363 = vst.msk [vmem:[%s292] sm:$0xff] %vm322, %v362
        $region60: #{tpu_custom_call.1} parent=35 // pred_fallthru
          _
        %s364 = sand.u32 %s132, 1
        %s365 = scalar_lea.sflag [#allocation4], %s364
        %s366 = sand.u32 %s132, 1
        %s367 = smul.addr %s366, 8
        %s368 = scalar_lea.vmem [#allocation10], %s367
        // Predicated region
        $region68: #{tpu_custom_call.1} parent=35 // pred_check
          %p369 = pneg %p142
        $region69: #{tpu_custom_call.1} parent=35 // pred_check_branch
          %371 = sbr.rel (%p369) target = $region71
        $region70: #{tpu_custom_call.1} parent=35 // pred_region
          %373 = vsyncadd %s365, 0
          %s374 = smul.addr %s25, 8
          %s375 = scalar_lea.hbm %s4, %s374
          %s377 = sshll.u32 %s368, 4
          %s378 = int_to_ptr.vmem [resolvable:$true] %s377
          %s379 = sshll.u32 %s375, 4
          %s380 = int_to_ptr.hbm [resolvable:$true] %s379
          %382 = dma.vmem_to_hbm [thread:$0]  %s378, 128, %s380, %s365
        $region71: #{tpu_custom_call.1} parent=35 // pred_fallthru
          _
      $region36: #{tpu_custom_call.1} parent=5 // pred_fallthru
        _
      %p383 = scmp.le.s32.totalorder 2, %s20
      // Predicated region
      $region72: #{tpu_custom_call.1} parent=5 // pred_check
        %p384 = pneg %p383
      $region73: #{tpu_custom_call.1} parent=5 // pred_check_branch
        %386 = sbr.rel (%p384) target = $region75
      $region74: #{tpu_custom_call.1} parent=5 // pred_region
        %s387 = ssub.s32 %s20, 2
        // Predicated region
        $region76: #{tpu_custom_call.1} parent=74 // pred_check
          %p388 = pneg %p148
        $region77: #{tpu_custom_call.1} parent=74 // pred_check_branch
          %390 = sbr.rel (%p388) target = $region79
        $region78: #{tpu_custom_call.1} parent=74 // pred_region
          %s391 = sand.u32 %s133, 1
          %s392 = scalar_lea.sflag [#allocation4], %s391
          %s393 = sand.u32 %s133, 1
          %s394 = smul.addr %s393, 8
          %s395 = scalar_lea.vmem [#allocation10], %s394
          %397 = dma.done %s392, 128
        $region79: #{tpu_custom_call.1} parent=74 // pred_fallthru
          _
      $region75: #{tpu_custom_call.1} parent=5 // pred_fallthru
        _
    $region6: #{tpu_custom_call.1} parent=1 // loop_footer
      %s24 = sadd.s32 1, %s20
    $region7: #{tpu_custom_call.1} parent=1 // loop_footer_branch
      %19 = sbr.rel target = $region3
    $region8: #{tpu_custom_call.1} parent=1 // loop_exit
      _
    %398 = vsyncpa [#allocation3], 1
    %s399 = scalar_lea.sflag [#allocation3], 1
    %400 = vsyncpa %s399, 1
    %401 = vsyncpa [#allocation6], 1
    %s402 = scalar_lea.sflag [#allocation6], 1
    %403 = vsyncpa %s402, 1
    %404 = vsyncpa [#allocation9], 1
    %s405 = scalar_lea.sflag [#allocation9], 1
    %406 = vsyncpa %s405, 1
    %407 = vsyncpa [#allocation4], 1
    %s408 = scalar_lea.sflag [#allocation4], 1
    %409 = vsyncpa %s408, 1

</llo_original>
